<compile_context>
chip_gen: v5e
topology: v5e:2x2
jax: 0.10.0
libtpu: 0.0.40
codegen_flags: <defaults>
</compile_context>

<pallas_src>
import functools

import jax
import jax.numpy as jnp
from jax import lax
from jax.experimental import pallas as pl
from jax.experimental.pallas import tpu as pltpu


# ----------------------------------------------------------------------------
# helpers
# ----------------------------------------------------------------------------
def _round_up(x, m):
    return ((x + m - 1) // m) * m


def _tpu_config():
    """Return (vmem_limit_bytes, is_v7x_like) derived from the attached TPU."""
    vmem_cap = 128 * 1024 * 1024
    try:
        vmem_cap = int(pltpu.get_tpu_info().vmem_capacity_bytes)
    except Exception:
        pass
    # v7x exposes 64 MiB per TensorCore (vs 128 MiB on v5e/v6e); use that as
    # the megacore / per-core-VMEM proxy.
    is_v7x_like = vmem_cap <= 96 * 1024 * 1024
    vmem_limit = min(vmem_cap * 3 // 4, 96 * 1024 * 1024)   # 48 MiB v7x, 96 MiB else
    return vmem_limit, is_v7x_like


def _channel_conv(pooled, w_ref, k, pad):
    """Zero-padded cross-correlation along axis 1 of `pooled` (R, C) f32.

    out[c] = sum_j w[j] * pooled[c + j - pad]   (matches nn.Conv1d, bias=False)
    Implemented with XLU rolls + edge masks (cheap; rides idle XLU slots).
    """
    C = pooled.shape[1]
    idx = lax.broadcasted_iota(jnp.int32, pooled.shape, 1)
    y = jnp.zeros_like(pooled)
    for j in range(k):
        shift = pad - j                         # rolled[c] = pooled[c - shift]
        if shift == 0:
            shifted = pooled
        else:
            shifted = pltpu.roll(pooled, shift=shift % C, axis=1)
            if shift > 0:                       # mask wrapped-around left edge
                shifted = jnp.where(idx < shift, 0.0, shifted)
            else:                               # mask wrapped-around right edge
                shifted = jnp.where(idx >= C + shift, 0.0, shifted)
        y = y + w_ref[j] * shifted
    return y


def _mask_channels(pooled, C):
    """Zero rows >= C (garbage from partial channel blocks) -> zero-pad conv."""
    if pooled.shape[1] == C:
        return pooled
    cidx = lax.broadcasted_iota(jnp.int32, pooled.shape, 1)
    return jnp.where(cidx < C, pooled, 0.0)


# ----------------------------------------------------------------------------
# fused fast path: bb batch elements per grid step, whole (CA, HW) slabs in VMEM
# ----------------------------------------------------------------------------
def _eca_fused_kernel(w_ref, x_ref, o_ref, *, C, inv_hw, k):
    x = x_ref[...]                                             # (bb, CA, HW)
    # Global average pool: f32-accumulated reduction (no full f32 tile copy).
    pooled = jnp.sum(x, axis=-1, dtype=jnp.float32) * inv_hw   # (bb, CA) f32
    pooled = _mask_channels(pooled, C)                         # garbage rows -> 0
    y = _channel_conv(pooled, w_ref, k, (k - 1) // 2)
    attn = jax.nn.sigmoid(y).astype(x.dtype)                   # (bb, CA)
    o_ref[...] = x * attn[:, :, None]                          # native-dtype multiply


def _eca_fused(x3, conv_weight, *, CA, bb, vmem_limit):
    B, C, HW = x3.shape
    k = conv_weight.shape[0]
    kernel = functools.partial(_eca_fused_kernel, C=C, inv_hw=1.0 / HW, k=k)
    return pl.pallas_call(
        kernel,
        out_shape=jax.ShapeDtypeStruct(x3.shape, x3.dtype),
        grid_spec=pl.GridSpec(
            grid=(pl.cdiv(B, bb),),
            in_specs=[
                pl.BlockSpec(memory_space=pltpu.MemorySpace.SMEM),     # conv weight
                pl.BlockSpec((bb, CA, HW), lambda i: (i, 0, 0)),       # x slab
            ],
            out_specs=pl.BlockSpec((bb, CA, HW), lambda i: (i, 0, 0)),
        ),
        compiler_params=pltpu.CompilerParams(
            dimension_semantics=("parallel",),
            vmem_limit_bytes=vmem_limit,
        ),
    )(conv_weight, x3)


# ----------------------------------------------------------------------------
# tiled two-pass path (no jnp.pad / slice copies; in-kernel tail masking)
# ----------------------------------------------------------------------------
def _pool_attn_kernel(w_ref, x_ref, a_ref, *, C, HW, hw_blk, inv_hw, k, mask_hw):
    # Single channel tile: pool over HW tiles, then fold conv+sigmoid into the
    # last-step epilogue.  a_ref (1, CA, 1) f32 is the resident accumulator.
    hi = pl.program_id(1)

    @pl.when(hi == 0)
    def _():
        a_ref[...] = jnp.zeros_like(a_ref)

    x = x_ref[...]
    if mask_hw:
        lane = lax.broadcasted_iota(jnp.int32, x.shape, 2) + hi * hw_blk
        x = jnp.where(lane < HW, x, jnp.zeros((), x.dtype))
    a_ref[...] += jnp.sum(x, axis=-1, keepdims=True, dtype=jnp.float32)

    @pl.when(hi == pl.num_programs(1) - 1)
    def _():
        pooled = _mask_channels(a_ref[...][:, :, 0] * inv_hw, C)     # (1, CA)
        y = _channel_conv(pooled, w_ref, k, (k - 1) // 2)
        a_ref[...] = jax.nn.sigmoid(y)[:, :, None]


def _pool_sum_kernel(x_ref, s_ref, *, HW, hw_blk, mask_hw):
    hi = pl.program_id(2)

    @pl.when(hi == 0)
    def _():
        s_ref[...] = jnp.zeros_like(s_ref)

    x = x_ref[...]
    if mask_hw:
        lane = lax.broadcasted_iota(jnp.int32, x.shape, 2) + hi * hw_blk
        x = jnp.where(lane < HW, x, jnp.zeros((), x.dtype))
    s_ref[...] += jnp.sum(x, axis=-1, keepdims=True, dtype=jnp.float32)


def _attn_kernel(w_ref, s_ref, a_ref, *, C, inv_hw, k):
    # s_ref: (B, CA, 1) f32 channel sums; a_ref: (B, CA, 1) f32 attention gate.
    pooled = _mask_channels(s_ref[...][:, :, 0] * inv_hw, C)         # (B, CA)
    y = _channel_conv(pooled, w_ref, k, (k - 1) // 2)
    a_ref[...] = jax.nn.sigmoid(y)[:, :, None]


def _scale_kernel(x_ref, a_ref, o_ref):
    # x_ref: (1, c_blk, hw_blk), a_ref: (1, c_blk, 1) -> lane broadcast multiply.
    o_ref[...] = x_ref[...] * a_ref[...].astype(x_ref.dtype)


def _eca_two_pass(x3, conv_weight, *, CA, vmem_limit, max_block_bytes=None):
    B, C, HW = x3.shape
    k = conv_weight.shape[0]
    itemsize = jnp.dtype(x3.dtype).itemsize

    # Per-block VMEM budget: pass 2 needs ~4x (in + out double-buffered).
    budget = vmem_limit // 6
    if max_block_bytes is not None:
        budget = min(budget, max_block_bytes)

    # Channel tile (multiple of 8); prefer a single tile covering all channels.
    if CA * 128 * itemsize <= budget:
        c_blk = CA
    else:
        c_blk = max(8, ((budget // (128 * itemsize)) // 8) * 8)
    n_c = pl.cdiv(CA, c_blk)

    # Lane-dense spatial tile (multiple of 128), as big as the budget allows.
    hw_blk = max(128, ((budget // (c_blk * itemsize)) // 128) * 128)
    hw_blk = min(hw_blk, _round_up(HW, 128))
    n_hw = pl.cdiv(HW, hw_blk)
    mask_hw = (HW % hw_blk) != 0

    inv_hw = 1.0 / HW

    if n_c == 1:
        # ---- pass 1 (folded): pooled sums + conv + sigmoid in one kernel ----
        attn = pl.pallas_call(
            functools.partial(_pool_attn_kernel, C=C, HW=HW, hw_blk=hw_blk,
                              inv_hw=inv_hw, k=k, mask_hw=mask_hw),
            out_shape=jax.ShapeDtypeStruct((B, CA, 1), jnp.float32),
            grid_spec=pl.GridSpec(
                grid=(B, n_hw),
                in_specs=[
                    pl.BlockSpec(memory_space=pltpu.MemorySpace.SMEM),
                    pl.BlockSpec((1, c_blk, hw_blk), lambda b, hi: (b, 0, hi)),
                ],
                out_specs=pl.BlockSpec((1, CA, 1), lambda b, hi: (b, 0, 0)),
            ),
            compiler_params=pltpu.CompilerParams(
                dimension_semantics=("parallel", "arbitrary"),
                vmem_limit_bytes=vmem_limit,
            ),
        )(conv_weight, x3)
    else:
        # ---- pass 1: per-(b, c-tile) f32 sums over the spatial axis ----
        sums = pl.pallas_call(
            functools.partial(_pool_sum_kernel, HW=HW, hw_blk=hw_blk,
                              mask_hw=mask_hw),
            out_shape=jax.ShapeDtypeStruct((B, CA, 1), jnp.float32),
            grid_spec=pl.GridSpec(
                grid=(B, n_c, n_hw),
                in_specs=[pl.BlockSpec((1, c_blk, hw_blk),
                                       lambda b, ci, hi: (b, ci, hi))],
                out_specs=pl.BlockSpec((1, c_blk, 1),
                                       lambda b, ci, hi: (b, ci, 0)),
            ),
            compiler_params=pltpu.CompilerParams(
                dimension_semantics=("parallel", "parallel", "arbitrary"),
                vmem_limit_bytes=vmem_limit,
            ),
        )(x3)

        # ---- tiny pass: attn = sigmoid(conv1d(mean)) on the (B, CA) rows ----
        attn = pl.pallas_call(
            functools.partial(_attn_kernel, C=C, inv_hw=inv_hw, k=k),
            out_shape=jax.ShapeDtypeStruct((B, CA, 1), jnp.float32),
            in_specs=[
                pl.BlockSpec(memory_space=pltpu.MemorySpace.SMEM),
                pl.BlockSpec(memory_space=pltpu.MemorySpace.VMEM),
            ],
            out_specs=pl.BlockSpec(memory_space=pltpu.MemorySpace.VMEM),
        )(conv_weight, sums)

    # ---- pass 2: fully parallel, lane-dense broadcast multiply ----
    out3 = pl.pallas_call(
        _scale_kernel,
        out_shape=jax.ShapeDtypeStruct((B, C, HW), x3.dtype),
        grid_spec=pl.GridSpec(
            grid=(B, n_c, n_hw),
            in_specs=[
                pl.BlockSpec((1, c_blk, hw_blk), lambda b, ci, hi: (b, ci, hi)),
                pl.BlockSpec((1, c_blk, 1), lambda b, ci, hi: (b, ci, 0)),
            ],
            out_specs=pl.BlockSpec((1, c_blk, hw_blk),
                                   lambda b, ci, hi: (b, ci, hi)),
        ),
        compiler_params=pltpu.CompilerParams(
            dimension_semantics=("parallel", "parallel", "parallel"),
            vmem_limit_bytes=vmem_limit,
        ),
    )(x3, attn)
    return out3


# ----------------------------------------------------------------------------
# public entry point
# ----------------------------------------------------------------------------
def eca_forward(x, conv_weight, *, force_two_pass=False, two_pass_block_bytes=None):
    """ECA forward. x: (B, C, H, W), conv_weight: (k_size,) f32."""
    B, C, H, W = x.shape
    HW = H * W
    itemsize = jnp.dtype(x.dtype).itemsize
    x3 = x.reshape(B, C, HW)                       # free, lane-dense view
    CA = _round_up(C, 8)

    vmem_limit, is_v7x = _tpu_config()
    fused_cap = vmem_limit // 5                    # ~4x blocks (dbl-buf in+out) + slack
    slab_bytes = CA * HW * itemsize                # per-batch-element fused block
    # v7x (2 TensorCores): need >= 4 grid steps so each core pipelines >= 2.
    min_steps = 4 if is_v7x else 2
    use_fused = ((not force_two_pass)
                 and slab_bytes <= fused_cap
                 and not (is_v7x and B < 4))

    if use_fused:
        bb = max(1, min(B, fused_cap // max(slab_bytes, 1)))
        if B >= min_steps:
            bb = min(bb, max(1, B // min_steps))
        out3 = _eca_fused(x3, conv_weight, CA=CA, bb=bb, vmem_limit=vmem_limit)
    else:
        out3 = _eca_two_pass(x3, conv_weight, CA=CA, vmem_limit=vmem_limit,
                             max_block_bytes=two_pass_block_bytes)
    return out3.reshape(B, C, H, W)


def eca_ref(x, conv_weight):
    """Pure-JAX reference (mirrors the PyTorch forward)."""
    pooled = jnp.mean(x.astype(jnp.float32), axis=(2, 3))   # (B, C)
    k = conv_weight.shape[0]
    pad = (k - 1) // 2
    pp = jnp.pad(pooled, ((0, 0), (pad, pad)))
    C = pooled.shape[1]
    y = sum(conv_weight[j] * pp[:, j:j + C] for j in range(k))
    attn = jax.nn.sigmoid(y).astype(x.dtype)
    return x * attn[:, :, None, None]


if __name__ == "__main__":
    key = jax.random.PRNGKey(0)
    kx1, kx2, kx3, kx4, kw = jax.random.split(key, 5)

    k_size = 3
    bound = 1.0 / (k_size ** 0.5)
    conv_weight = jax.random.uniform(
        kw, (k_size,), minval=-bound, maxval=bound, dtype=jnp.float32)

    def check(x, **kwargs):
        out = jax.block_until_ready(eca_forward(x, conv_weight, **kwargs))
        ref = eca_ref(x, conv_weight)
        assert out.shape == x.shape and out.dtype == x.dtype
        assert jnp.allclose(out, ref, atol=1e-5, rtol=1e-5), (
            float(jnp.max(jnp.abs(out - ref))))

    # 1) aligned shape, batch-blocked fused path (two-pass on v7x-like chips)
    x1 = jax.random.normal(kx1, (8, 16, 16, 16), dtype=jnp.float32)
    check(x1)

    # 2) forced two-pass, single channel tile (pool+conv+sigmoid folded kernel)
    x2 = jax.random.normal(kx2, (2, 8, 16, 16), dtype=jnp.float32)
    check(x2, force_two_pass=True)

    # 3) unaligned C / HW: default routing and forced two-pass
    x3 = jax.random.normal(kx3, (3, 6, 10, 12), dtype=jnp.float32)
    check(x3)
    check(x3, force_two_pass=True)

    # 4) forced multi-tile two-pass (n_c > 1, ragged HW tail, in-kernel masks)
    x4 = jax.random.normal(kx4, (2, 16, 15, 20), dtype=jnp.float32)
    check(x4, force_two_pass=True, two_pass_block_bytes=8 * 128 * 4)

    print("KERNEL_OK")
</pallas_src>

<mosaic_0001>
module attributes {stable_mosaic.version = 11 : i64} {
  func.func @_eca_fused_kernel(%arg0: i32, %arg1: memref<3xf32, #tpu.memory_space<smem>>, %arg2: memref<4x16x256xf32, #tpu.memory_space<vmem>>, %arg3: memref<4x16x256xf32, #tpu.memory_space<vmem>>) attributes {dimension_semantics = [#tpu.dimension_semantics<parallel>], iteration_bounds = array<i64: 2>, scalar_prefetch = 0 : i64, scratch_operands = 0 : i64, tpu.core_type = #tpu.core_type<tc>, window_params = [{transform_indices = @transform_0, window_bounds = array<i64: 3>}, {transform_indices = @transform_1, window_bounds = array<i64: 4, 16, 256>}, {transform_indices = @transform_2, window_bounds = array<i64: 4, 16, 256>}]} {
    %c0 = arith.constant 0 : index
    %c0_0 = arith.constant 0 : index
    %c0_1 = arith.constant 0 : index
    %0 = vector.load %arg2[%c0, %c0_0, %c0_1] : memref<4x16x256xf32, #tpu.memory_space<vmem>>, vector<4x16x256xf32>
    %cst = arith.constant dense<0.000000e+00> : vector<4x16xf32>
    %1 = vector.multi_reduction <add>, %0, %cst [2] : vector<4x16x256xf32> to vector<4x16xf32>
    %cst_2 = arith.constant 3.906250e-03 : f32
    %2 = vector.broadcast %cst_2 : f32 to vector<4x16xf32>
    %3 = arith.mulf %1, %2 : vector<4x16xf32>
    %4 = tpu.iota {dimensions = array<i32: 1>} : vector<4x16xi32>
    %cst_3 = arith.constant 0.000000e+00 : f32
    %5 = vector.broadcast %cst_3 : f32 to vector<4x16xf32>
    %c1_i32 = arith.constant 1 : i32
    %6 = tpu.dynamic_rotate %3 by %c1_i32 dim 1 : vector<4x16xf32>, i32 -> vector<4x16xf32>
    %c1_i32_4 = arith.constant 1 : i32
    %7 = vector.broadcast %c1_i32_4 : i32 to vector<4x16xi32>
    %8 = arith.cmpi slt, %4, %7 : vector<4x16xi32>
    %cst_5 = arith.constant 0.000000e+00 : f32
    %9 = vector.broadcast %cst_5 : f32 to vector<4x16xf32>
    %10 = arith.select %8, %9, %6 : vector<4x16xi1>, vector<4x16xf32>
    %c0_6 = arith.constant 0 : index
    %11 = memref.load %arg1[%c0_6] : memref<3xf32, #tpu.memory_space<smem>>
    %12 = vector.broadcast %11 : f32 to vector<4x16xf32>
    %13 = arith.mulf %12, %10 : vector<4x16xf32>
    %14 = arith.addf %5, %13 : vector<4x16xf32>
    %c1 = arith.constant 1 : index
    %15 = memref.load %arg1[%c1] : memref<3xf32, #tpu.memory_space<smem>>
    %16 = vector.broadcast %15 : f32 to vector<4x16xf32>
    %17 = arith.mulf %16, %3 : vector<4x16xf32>
    %18 = arith.addf %14, %17 : vector<4x16xf32>
    %c15_i32 = arith.constant 15 : i32
    %19 = tpu.dynamic_rotate %3 by %c15_i32 dim 1 : vector<4x16xf32>, i32 -> vector<4x16xf32>
    %c15_i32_7 = arith.constant 15 : i32
    %20 = vector.broadcast %c15_i32_7 : i32 to vector<4x16xi32>
    %21 = arith.cmpi sge, %4, %20 : vector<4x16xi32>
    %cst_8 = arith.constant 0.000000e+00 : f32
    %22 = vector.broadcast %cst_8 : f32 to vector<4x16xf32>
    %23 = arith.select %21, %22, %19 : vector<4x16xi1>, vector<4x16xf32>
    %c2 = arith.constant 2 : index
    %24 = memref.load %arg1[%c2] : memref<3xf32, #tpu.memory_space<smem>>
    %25 = vector.broadcast %24 : f32 to vector<4x16xf32>
    %26 = arith.mulf %25, %23 : vector<4x16xf32>
    %27 = arith.addf %18, %26 : vector<4x16xf32>
    %28 = arith.negf %27 : vector<4x16xf32>
    %29 = math.exp %28 : vector<4x16xf32>
    %cst_9 = arith.constant 1.000000e+00 : f32
    %30 = vector.broadcast %cst_9 : f32 to vector<4x16xf32>
    %31 = arith.addf %30, %29 : vector<4x16xf32>
    %32 = arith.divf %30, %31 : vector<4x16xf32>
    %33 = vector.shape_cast %32 : vector<4x16xf32> to vector<4x16x1xf32>
    %34 = vector.broadcast %33 : vector<4x16x1xf32> to vector<4x16x256xf32>
    %35 = arith.mulf %0, %34 : vector<4x16x256xf32>
    %c0_10 = arith.constant 0 : index
    %c0_11 = arith.constant 0 : index
    %c0_12 = arith.constant 0 : index
    %36 = vector.load %arg3[%c0_10, %c0_11, %c0_12] : memref<4x16x256xf32, #tpu.memory_space<vmem>>, vector<4x16x256xf32>
    tpu.vector_store %arg3[%c0_10, %c0_11, %c0_12], %35 {strides = array<i32>} : memref<4x16x256xf32, #tpu.memory_space<vmem>>, vector<4x16x256xf32>,
    return
  }
  func.func @transform_0(%arg0: i32) -> i32 {
    %c0_i32 = arith.constant 0 : i32
    %c0_i32_0 = arith.constant 0 : i32
    return %c0_i32 : i32
  }
  func.func @transform_1(%arg0: i32) -> (i32, i32, i32) {
    %c0_i32 = arith.constant 0 : i32
    %c0_i32_0 = arith.constant 0 : i32
    %c0_i32_1 = arith.constant 0 : i32
    return %arg0, %c0_i32, %c0_i32_0 : i32, i32, i32
  }
  func.func @transform_2(%arg0: i32) -> (i32, i32, i32) {
    %c0_i32 = arith.constant 0 : i32
    %c0_i32_0 = arith.constant 0 : i32
    %c0_i32_1 = arith.constant 0 : i32
    return %arg0, %c0_i32, %c0_i32_0 : i32, i32, i32
  }
}

</mosaic_0001>

<llo_original>
// kernel: tpu_custom_call.1
$region0: #{tpu_custom_call.1}
  #allocation0 [shape = 'u32[]', space=smem, size = 0x4, offset = 0x4, fixed_abs, tag = 'smem constant byte address 0x4 - core index']
  #allocation1 [shape = 'u32[72,128]{1,0:T(1,128)}', space=vmem, size = 0x9000, scoped, tag = 'internal scratch']
  %s0 = inlined_call_operand.hbm [shape: f32[3], index: 0, kind: input, shape index: {}]
  %s1 = inlined_call_operand.hbm [shape: f32[8,16,256], index: 1, kind: input, shape index: {}]
  %s2 = inlined_call_operand.hbm [shape: f32[8,16,256], index: 2, kind: output, shape index: {}]
  %s3 = sld [smem:[#allocation0]]
  $region49: #{tpu_custom_call.1} parent=0
    _
  %s5 = ssub.s32 1, %s3
  %s6 = scalar_select 0, %s5, %s3
  $region1: #{tpu_custom_call.1} parent=0
    #allocation2 [shape = 'u8[512]{0}', space=smem, size = 0x200, scoped, tag = 'input window, operand 0, single buffered']
    #allocation3 [shape = 's32[2]{0}', space=sflag, size = 0x8, scoped, tag = 'scoped memory for tpu_custom_call.1']
    #allocation4 [shape = 's32[2]{0}', space=sflag, size = 0x8, scoped, tag = 'scoped memory for tpu_custom_call.1']
    #allocation5 [shape = 's32[2]{0}', space=sflag, size = 0x8, scoped, tag = 'scoped memory for tpu_custom_call.1']
    #allocation6 [shape = 'u8[131072]{0}', space=vmem, size = 0x20000, scoped, tag = 'input window, operand 1']
    #allocation7 [shape = 'u8[131072]{0}', space=vmem, size = 0x20000, scoped, tag = 'output window, operand 0']
    %7 = vsyncpa [#allocation5], 0
    %8 = vsyncpa [#allocation3], 0
    %s9 = scalar_lea.sflag [#allocation3], 1
    %10 = vsyncpa %s9, 0
    %11 = vsyncpa [#allocation4], 0
    %s12 = scalar_lea.sflag [#allocation4], 1
    %13 = vsyncpa %s12, 0
    loop: start=0, step=1, limit=4
    $region2: #{tpu_custom_call.1} parent=1 // loop_pre_header
      _
    $region3: #{tpu_custom_call.1} parent=1 // loop_header
      %s15 = sphi 0, %s19
      %p16 = scmp.ge.s32.totalorder %s15, 4
      %s23 = sphi 0, %s23
      %s25 = sphi 0, %s23
      %s26 = sphi 0, %s25
      %s40 = sphi 0, %s26
      %s46 = sphi 0, %s48
      %s49 = sphi 0, %s46
      %s50 = sphi 0, %s49
      %s66 = sphi 0, %s50
      %s72 = sphi 0, %s74
      %s75 = sphi 0, %s72
      %s76 = sphi 0, %s75
      %s92 = sphi 0, %s76
    $region4: #{tpu_custom_call.1} parent=1 // loop_header_branch
      %18 = sbr.rel (%p16) target = $region8
    $region5: #{tpu_custom_call.1} parent=1 // loop_body
      %s20 = ssub.s32 %s15, 1
      %s21 = ssub.s32 %s15, 2
      %s22 = sadd.s32 %s15, 1
      %s24 = sadd.s32 %s23, 1
      %p27 = scmp.eq.s32.totalorder %s15, 1
      %p28 = scmp.ne.s32.totalorder %s23, %s25
      %p29 = scmp.eq.s32.totalorder %s15, 0
      %p30 = por %p28, %p29
      %p31 = scmp.ne.s32.totalorder %s23, %s25
      %p32 = scmp.eq.s32.totalorder %s20, 1
      %p33 = por %p31, %p32
      %p34 = scmp.ne.s32.totalorder %s25, %s26
      %p35 = scmp.eq.s32.totalorder %s20, 0
      %p36 = por %p34, %p35
      %p37 = scmp.ne.s32.totalorder %s25, %s26
      %p38 = scmp.eq.s32.totalorder %s21, 1
      %p39 = por %p37, %p38
      %p41 = scmp.ne.s32.totalorder %s26, %s40
      %p42 = scmp.eq.s32.totalorder %s21, 0
      %p43 = por %p41, %p42
      %s44 = ssub.s32 %s15, %s22
      %p45 = scmp.eq.s32.totalorder %s44, 0
      %s47 = sadd.s32 %s46, 1
      %s48 = scalar_select %p45, %s46, %s47
      %p51 = pneg %p45
      %p52 = scmp.eq.s32.totalorder %s15, 1
      %p53 = por %p51, %p52
      %p54 = scmp.ne.s32.totalorder %s46, %s49
      %p55 = scmp.eq.s32.totalorder %s15, 0
      %p56 = por %p54, %p55
      %p57 = scmp.ne.s32.totalorder %s46, %s49
      %p58 = scmp.eq.s32.totalorder %s20, 1
      %p59 = por %p57, %p58
      %p60 = scmp.ne.s32.totalorder %s49, %s50
      %p61 = scmp.eq.s32.totalorder %s20, 0
      %p62 = por %p60, %p61
      %p63 = scmp.ne.s32.totalorder %s49, %s50
      %p64 = scmp.eq.s32.totalorder %s21, 1
      %p65 = por %p63, %p64
      %p67 = scmp.ne.s32.totalorder %s50, %s66
      %p68 = scmp.eq.s32.totalorder %s21, 0
      %p69 = por %p67, %p68
      %s70 = ssub.s32 %s15, %s22
      %p71 = scmp.eq.s32.totalorder %s70, 0
      %s73 = sadd.s32 %s72, 1
      %s74 = scalar_select %p71, %s72, %s73
      %p77 = pneg %p71
      %p78 = scmp.eq.s32.totalorder %s15, 1
      %p79 = por %p77, %p78
      %p80 = scmp.ne.s32.totalorder %s72, %s75
      %p81 = scmp.eq.s32.totalorder %s15, 0
      %p82 = por %p80, %p81
      %p83 = scmp.ne.s32.totalorder %s72, %s75
      %p84 = scmp.eq.s32.totalorder %s20, 1
      %p85 = por %p83, %p84
      %p86 = scmp.ne.s32.totalorder %s75, %s76
      %p87 = scmp.eq.s32.totalorder %s20, 0
      %p88 = por %p86, %p87
      %p89 = scmp.ne.s32.totalorder %s75, %s76
      %p90 = scmp.eq.s32.totalorder %s21, 1
      %p91 = por %p89, %p90
      %p93 = scmp.ne.s32.totalorder %s76, %s92
      %p94 = scmp.eq.s32.totalorder %s21, 0
      %p95 = por %p93, %p94
      %p96 = scmp.le.s32.totalorder 1, %s15
      %p97 = scmp.lt.s32.totalorder %s15, 3
      %p98 = pnand %p96, %p97
      %p99 = pneg %p98
      // Predicated region
      $region9: #{tpu_custom_call.1} parent=5 // pred_check
        _
      $region10: #{tpu_custom_call.1} parent=5 // pred_check_branch
        %101 = sbr.rel (%p98) target = $region12
      $region11: #{tpu_custom_call.1} parent=5 // pred_region
        %s102 = ssub.s32 %s15, 1
        // Predicated region
        $region13: #{tpu_custom_call.1} parent=11 // pred_check
          %p103 = pneg %p36
        $region14: #{tpu_custom_call.1} parent=11 // pred_check_branch
          %105 = sbr.rel (%p103) target = $region16
        $region15: #{tpu_custom_call.1} parent=11 // pred_region
          %107 = vsyncadd [#allocation5], 0
          %s109 = sshll.u32 %s0, 4
          %s110 = int_to_ptr.hbm [resolvable:$true] %s109
          %112 = dma.hbm_to_smem %s110, 16, [#allocation2], [#allocation5]
        $region16: #{tpu_custom_call.1} parent=11 // pred_fallthru
          _
      $region12: #{tpu_custom_call.1} parent=5 // pred_fallthru
        _
      %p113 = scmp.lt.s32.totalorder %s15, 2
      // Predicated region
      $region17: #{tpu_custom_call.1} parent=5 // pred_check
        %p114 = pneg %p113
      $region18: #{tpu_custom_call.1} parent=5 // pred_check_branch
        %116 = sbr.rel (%p114) target = $region20
      $region19: #{tpu_custom_call.1} parent=5 // pred_region
        // Predicated region
        $region21: #{tpu_custom_call.1} parent=19 // pred_check
          %p117 = pneg %p56
        $region22: #{tpu_custom_call.1} parent=19 // pred_check_branch
          %119 = sbr.rel (%p117) target = $region24
        $region23: #{tpu_custom_call.1} parent=19 // pred_region
          %s120 = sand.u32 %s46, 1
          %s121 = scalar_lea.sflag [#allocation3], %s120
          %s122 = sand.u32 %s46, 1
          %s123 = smul.addr %s122, 128
          %s124 = scalar_lea.vmem [#allocation6], %s123
          %s125 = smul.u32 4, %s15
          %127 = vsyncadd %s121, 0
          %s128 = smul.addr %s125, 4
          %s129 = smul.addr %s128, 8
          %s130 = scalar_lea.hbm %s1, %s129
          %s131 = sshll.u32 %s130, 4
          %s132 = int_to_ptr.hbm [resolvable:$true] %s131
          %s133 = sshll.u32 %s124, 4
          %s134 = int_to_ptr.vmem [resolvable:$true] %s133
          %139 = dma.hbm_to_vmem [thread:$0]  %s132, 2048, %s134, %s121, 256, 256, 16
        $region24: #{tpu_custom_call.1} parent=19 // pred_fallthru
          _
      $region20: #{tpu_custom_call.1} parent=5 // pred_fallthru
        _
      %p140 = scmp.le.s32.totalorder 1, %s15
      %p141 = scmp.lt.s32.totalorder %s15, 3
      %p142 = pnand %p140, %p141
      %p143 = pneg %p142
      // Predicated region
      $region25: #{tpu_custom_call.1} parent=5 // pred_check
        _
      $region26: #{tpu_custom_call.1} parent=5 // pred_check_branch
        %145 = sbr.rel (%p142) target = $region28
      $region27: #{tpu_custom_call.1} parent=5 // pred_region
        %s146 = ssub.s32 %s15, 1
        // Predicated region
        $region29: #{tpu_custom_call.1} parent=27 // pred_check
          %p147 = pneg %p36
        $region30: #{tpu_custom_call.1} parent=27 // pred_check_branch
          %149 = sbr.rel (%p147) target = $region32
        $region31: #{tpu_custom_call.1} parent=27 // pred_region
          %151 = dma.done [#allocation5], 16
        $region32: #{tpu_custom_call.1} parent=27 // pred_fallthru
          _
        %s152 = sand.u32 %s49, 1
        %s153 = scalar_lea.sflag [#allocation3], %s152
        %s154 = sand.u32 %s49, 1
        %s155 = smul.addr %s154, 128
        %s156 = scalar_lea.vmem [#allocation6], %s155
        // Predicated region
        $region33: #{tpu_custom_call.1} parent=27 // pred_check
          %p157 = pneg %p62
        $region34: #{tpu_custom_call.1} parent=27 // pred_check_branch
          %159 = sbr.rel (%p157) target = $region36
        $region35: #{tpu_custom_call.1} parent=27 // pred_region
          %161 = dma.done %s153, 2048
        $region36: #{tpu_custom_call.1} parent=27 // pred_fallthru
          _
        %162 = sfence
        %p163 = pneg %p36
        %p164 = pneg %p33
        %s165 = sand.u32 %s49, 1
        %s166 = scalar_lea.sflag [#allocation3], %s165
        %s167 = sand.u32 %s49, 1
        %s168 = smul.addr %s167, 128
        %s169 = scalar_lea.vmem [#allocation6], %s168
        %p170 = pneg %p62
        %p171 = pneg %p59
        %p172 = pneg %p88
        %p173 = pneg %p85
        %s174 = sand.u32 %s75, 1
        %s175 = scalar_lea.sflag [#allocation4], %s174
        %s176 = sand.u32 %s75, 1
        %s177 = smul.addr %s176, 128
        %s178 = scalar_lea.vmem [#allocation7], %s177
        %s179 = smul.u32 4, %s20
        %s180 = smul.u32 4, %s20
        %v181 = vld [vmem:[%s156] sm:$0xff]
        %v182 = vld [vmem:[%s156 + $0x8] sm:$0xff]
        %v183 = vld [vmem:[%s156 + $0x10] sm:$0xff]
        %v184 = vld [vmem:[%s156 + $0x18] sm:$0xff]
        %v185 = vld [vmem:[%s156 + $0x20] sm:$0xff]
        %v186 = vld [vmem:[%s156 + $0x28] sm:$0xff]
        %v187 = vld [vmem:[%s156 + $0x30] sm:$0xff]
        %v188 = vld [vmem:[%s156 + $0x38] sm:$0xff]
        %v189 = vld [vmem:[%s156 + $0x40] sm:$0xff]
        %v190 = vld [vmem:[%s156 + $0x48] sm:$0xff]
        %v191 = vld [vmem:[%s156 + $0x50] sm:$0xff]
        %v192 = vld [vmem:[%s156 + $0x58] sm:$0xff]
        %v193 = vld [vmem:[%s156 + $0x60] sm:$0xff]
        %v194 = vld [vmem:[%s156 + $0x68] sm:$0xff]
        %v195 = vld [vmem:[%s156 + $0x70] sm:$0xff]
        %v196 = vld [vmem:[%s156 + $0x78] sm:$0xff]
        %v197 = vadd.f32 %v181, %v182
        %198 = vadd.xlane.f32.xlu0 %v197
        %v199 = vpop.xlane.xlu0 %198
        %v200 = vadd.f32 %v183, %v184
        %201 = vadd.xlane.f32.xlu0 %v200
        %v202 = vpop.xlane.xlu0 %201
        %v203 = vadd.f32 %v185, %v186
        %204 = vadd.xlane.f32.xlu0 %v203
        %v205 = vpop.xlane.xlu0 %204
        %v206 = vadd.f32 %v187, %v188
        %207 = vadd.xlane.f32.xlu0 %v206
        %v208 = vpop.xlane.xlu0 %207
        %v209 = vadd.f32 %v189, %v190
        %210 = vadd.xlane.f32.xlu0 %v209
        %v211 = vpop.xlane.xlu0 %210
        %v212 = vadd.f32 %v191, %v192
        %213 = vadd.xlane.f32.xlu0 %v212
        %v214 = vpop.xlane.xlu0 %213
        %v215 = vadd.f32 %v193, %v194
        %216 = vadd.xlane.f32.xlu0 %v215
        %v217 = vpop.xlane.xlu0 %216
        %v218 = vadd.f32 %v195, %v196
        %219 = vadd.xlane.f32.xlu0 %v218
        %v220 = vpop.xlane.xlu0 %219
        %v221 = vmul.f32 %v199, 0.00390625
        %v222 = vmul.f32 %v202, 0.00390625
        %v223 = vmul.f32 %v205, 0.00390625
        %v224 = vmul.f32 %v208, 0.00390625
        %v225 = vmul.f32 %v211, 0.00390625
        %v226 = vmul.f32 %v214, 0.00390625
        %v227 = vmul.f32 %v217, 0.00390625
        %v228 = vmul.f32 %v220, 0.00390625
        %v229 = vlaneseq
        %v230 = vand.u32 %v229, 127
        %v239 = vperm.slane %v221, %v230
        %v240 = vadd.s32 %v230, 4294967288
        %v241 = vperm.slane %v222, %v240
        %vm242 = vcmask 130112
        %v243 = vsel %vm242, %v241, %v239
        %v244 = vperm.slane %v223, %v230
        %v245 = vperm.slane %v224, %v240
        %v246 = vsel %vm242, %v245, %v244
        %v247 = vperm.slane %v225, %v230
        %v248 = vperm.slane %v226, %v240
        %v249 = vsel %vm242, %v248, %v247
        %v250 = vperm.slane %v227, %v230
        %v251 = vperm.slane %v228, %v240
        %v252 = vsel %vm242, %v251, %v250
        %vm253 = vcmask 1041409
        %v254 = vsel %vm253, %v246, %v243
        %vm255 = vcmask 1042434
        %v256 = vsel %vm255, %v249, %v254
        %vm257 = vcmask 1043459
        %v258 = vsel %vm257, %v252, %v256
        %vm260 = vcmask 1047680
        %261 = vrot.lane.b32.xlu0 %v258, 16
        %v262 = vpop.permute.xlu0 %261
        %v263 = vsel %vm260, %v262, %v258
        %264 = vrot.lane.b32.xlu0 %v263, 16
        %v265 = vpop.permute.xlu0 %264
        %v266 = vsel %vm260, %v265, %v258
        %vm267 = vcmp.lt.s32.totalorder %v230, 1
        %269 = vrot.lane.b32.xlu0 %v266, 113
        %v270 = vpop.permute.xlu0 %269
        %v272 = vsel %vm267, 0.0, %v270
        %s273 = sld [smem:[#allocation2]]
        %v274 = vstv %s273
        %v275 = vmul.f32 %v274, %v272
        %v276 = vadd.f32 %v275, 0.0
        %s277 = sld [smem:[#allocation2 + $0x1]]
        %v278 = vstv %s277
        %v279 = vmul.f32 %v278, %v221
        %v280 = vmul.f32 %v278, %v222
        %v281 = vmul.f32 %v278, %v223
        %v282 = vmul.f32 %v278, %v224
        %v283 = vmul.f32 %v278, %v225
        %v284 = vmul.f32 %v278, %v226
        %v285 = vmul.f32 %v278, %v227
        %v286 = vmul.f32 %v278, %v228
        %v295 = vperm.slane %v279, %v230
        %v296 = vperm.slane %v280, %v240
        %v297 = vsel %vm242, %v296, %v295
        %v298 = vperm.slane %v281, %v230
        %v299 = vperm.slane %v282, %v240
        %v300 = vsel %vm242, %v299, %v298
        %v301 = vperm.slane %v283, %v230
        %v302 = vperm.slane %v284, %v240
        %v303 = vsel %vm242, %v302, %v301
        %v304 = vperm.slane %v285, %v230
        %v305 = vperm.slane %v286, %v240
        %v306 = vsel %vm242, %v305, %v304
        %v307 = vsel %vm253, %v300, %v297
        %v308 = vsel %vm255, %v303, %v307
        %v309 = vsel %vm257, %v306, %v308
        %v311 = vadd.f32 %v276, %v309
        %vm312 = vcmp.ge.s32.totalorder %v230, 15
        %313 = vrot.lane.b32.xlu0 %v266, 127
        %v314 = vpop.permute.xlu0 %313
        %v316 = vsel %vm312, 0.0, %v314
        %s317 = sld [smem:[#allocation2 + $0x2]]
        %v318 = vstv %s317
        %v319 = vmul.f32 %v318, %v316
        %v320 = vadd.f32 %v311, %v319
        %v321 = vxor.u32 %v320, 2147483648
        %v322 = vmul.f32 %v321, 1.442695
        %v323 = vpow.pop %v322
        %v324 = vadd.f32 %v323, 1.0
        %v325 = vrcp.pop %v324
        %v326 = vmul.f32 %v324, %v325
        %v327 = vsub.f32 1.0, %v326
        %v328 = vmul.f32 %v325, %v327
        %v329 = vadd.f32 %v325, %v328
        %vm330 = vweird.f32 %v324
        %vm331 = vweird.f32 %v325
        %vm332 = vmor %vm330, %vm331
        %v333 = vsel %vm332, %v325, %v329
        %v334 = vand.u32 2147483647, %v324
        %vm335 = vcmp.eq.f32.partialorder %v334, 8.507059e+37
        %v336 = vand.u32 %v324, 2147483648
        %v337 = vor.u32 1.1754944e-38, %v336
        %v338 = vsel %vm335, %v337, %v333
        %v339 = vmul.f32 1.0, %v338
        %v340 = vperm.slane %v339, 0
        %v341 = vlaneseq
        %v342 = vshrl.u32 %v341, 7
        %344 = vset.pattern.permute.xlu0 %v342
        %345 = vperm.xlu0 %344, %v340
        %v346 = vpop.permute.xlu0 %345
        %v347 = vlaneseq
        %v348 = vshrl.u32 %v347, 7
        %v349 = vadd.s32 %v348, 8
        %350 = vset.pattern.permute.xlu0 %v349
        %351 = vperm.xlu0 %350, %v340
        %v352 = vpop.permute.xlu0 %351
        %v353 = vperm.slane %v339, 1
        %v354 = vlaneseq
        %v355 = vshrl.u32 %v354, 7
        %357 = vset.pattern.permute.xlu0 %v355
        %358 = vperm.xlu0 %357, %v353
        %v359 = vpop.permute.xlu0 %358
        %v360 = vlaneseq
        %v361 = vshrl.u32 %v360, 7
        %v362 = vadd.s32 %v361, 8
        %363 = vset.pattern.permute.xlu0 %v362
        %364 = vperm.xlu0 %363, %v353
        %v365 = vpop.permute.xlu0 %364
        %v366 = vperm.slane %v339, 2
        %v367 = vlaneseq
        %v368 = vshrl.u32 %v367, 7
        %370 = vset.pattern.permute.xlu0 %v368
        %371 = vperm.xlu0 %370, %v366
        %v372 = vpop.permute.xlu0 %371
        %v373 = vlaneseq
        %v374 = vshrl.u32 %v373, 7
        %v375 = vadd.s32 %v374, 8
        %376 = vset.pattern.permute.xlu0 %v375
        %377 = vperm.xlu0 %376, %v366
        %v378 = vpop.permute.xlu0 %377
        %v379 = vperm.slane %v339, 3
        %v380 = vlaneseq
        %v381 = vshrl.u32 %v380, 7
        %383 = vset.pattern.permute.xlu0 %v381
        %384 = vperm.xlu0 %383, %v379
        %v385 = vpop.permute.xlu0 %384
        %v386 = vlaneseq
        %v387 = vshrl.u32 %v386, 7
        %v388 = vadd.s32 %v387, 8
        %389 = vset.pattern.permute.xlu0 %v388
        %390 = vperm.xlu0 %389, %v379
        %v391 = vpop.permute.xlu0 %390
        %v392 = vmul.f32 %v181, %v346
        %v393 = vmul.f32 %v182, %v346
        %v394 = vmul.f32 %v183, %v352
        %v395 = vmul.f32 %v184, %v352
        %v396 = vmul.f32 %v185, %v359
        %v397 = vmul.f32 %v186, %v359
        %v398 = vmul.f32 %v187, %v365
        %v399 = vmul.f32 %v188, %v365
        %v400 = vmul.f32 %v189, %v372
        %v401 = vmul.f32 %v190, %v372
        %v402 = vmul.f32 %v191, %v378
        %v403 = vmul.f32 %v192, %v378
        %v404 = vmul.f32 %v193, %v385
        %v405 = vmul.f32 %v194, %v385
        %v406 = vmul.f32 %v195, %v391
        %v407 = vmul.f32 %v196, %v391
        %408 = vst [vmem:[%s178] sm:$0xff] %v392
        %409 = vst [vmem:[%s178 + $0x8] sm:$0xff] %v393
        %410 = vst [vmem:[%s178 + $0x10] sm:$0xff] %v394
        %411 = vst [vmem:[%s178 + $0x18] sm:$0xff] %v395
        %412 = vst [vmem:[%s178 + $0x20] sm:$0xff] %v396
        %413 = vst [vmem:[%s178 + $0x28] sm:$0xff] %v397
        %414 = vst [vmem:[%s178 + $0x30] sm:$0xff] %v398
        %415 = vst [vmem:[%s178 + $0x38] sm:$0xff] %v399
        %416 = vst [vmem:[%s178 + $0x40] sm:$0xff] %v400
        %417 = vst [vmem:[%s178 + $0x48] sm:$0xff] %v401
        %418 = vst [vmem:[%s178 + $0x50] sm:$0xff] %v402
        %419 = vst [vmem:[%s178 + $0x58] sm:$0xff] %v403
        %420 = vst [vmem:[%s178 + $0x60] sm:$0xff] %v404
        %421 = vst [vmem:[%s178 + $0x68] sm:$0xff] %v405
        %422 = vst [vmem:[%s178 + $0x70] sm:$0xff] %v406
        %423 = vst [vmem:[%s178 + $0x78] sm:$0xff] %v407
        %s424 = sand.u32 %s75, 1
        %s425 = scalar_lea.sflag [#allocation4], %s424
        %s426 = sand.u32 %s75, 1
        %s427 = smul.addr %s426, 128
        %s428 = scalar_lea.vmem [#allocation7], %s427
        // Predicated region
        $region37: #{tpu_custom_call.1} parent=27 // pred_check
          %p429 = pneg %p85
        $region38: #{tpu_custom_call.1} parent=27 // pred_check_branch
          %431 = sbr.rel (%p429) target = $region40
        $region39: #{tpu_custom_call.1} parent=27 // pred_region
          %s432 = smul.u32 4, %s20
          %434 = vsyncadd %s425, 0
          %s435 = smul.addr %s432, 4
          %s436 = smul.addr %s435, 8
          %s437 = scalar_lea.hbm %s2, %s436
          %s438 = sshll.u32 %s428, 4
          %s439 = int_to_ptr.vmem [resolvable:$true] %s438
          %s440 = sshll.u32 %s437, 4
          %s441 = int_to_ptr.hbm [resolvable:$true] %s440
          %446 = dma.vmem_to_hbm [thread:$0]  %s439, 2048, %s441, %s425, 256, 256, 16
        $region40: #{tpu_custom_call.1} parent=27 // pred_fallthru
          _
      $region28: #{tpu_custom_call.1} parent=5 // pred_fallthru
        _
      %p447 = scmp.le.s32.totalorder 2, %s15
      // Predicated region
      $region41: #{tpu_custom_call.1} parent=5 // pred_check
        %p448 = pneg %p447
      $region42: #{tpu_custom_call.1} parent=5 // pred_check_branch
        %450 = sbr.rel (%p448) target = $region44
      $region43: #{tpu_custom_call.1} parent=5 // pred_region
        %s451 = ssub.s32 %s15, 2
        // Predicated region
        $region45: #{tpu_custom_call.1} parent=43 // pred_check
          %p452 = pneg %p91
        $region46: #{tpu_custom_call.1} parent=43 // pred_check_branch
          %454 = sbr.rel (%p452) target = $region48
        $region47: #{tpu_custom_call.1} parent=43 // pred_region
          %s455 = sand.u32 %s76, 1
          %s456 = scalar_lea.sflag [#allocation4], %s455
          %s457 = sand.u32 %s76, 1
          %s458 = smul.addr %s457, 128
          %s459 = scalar_lea.vmem [#allocation7], %s458
          %461 = dma.done %s456, 2048
        $region48: #{tpu_custom_call.1} parent=43 // pred_fallthru
          _
      $region44: #{tpu_custom_call.1} parent=5 // pred_fallthru
        _
    $region6: #{tpu_custom_call.1} parent=1 // loop_footer
      %s19 = sadd.s32 1, %s15
    $region7: #{tpu_custom_call.1} parent=1 // loop_footer_branch
      %14 = sbr.rel target = $region3
    $region8: #{tpu_custom_call.1} parent=1 // loop_exit
      _
    %462 = vsyncpa [#allocation3], 1
    %s463 = scalar_lea.sflag [#allocation3], 1
    %464 = vsyncpa %s463, 1
    %465 = vsyncpa [#allocation4], 1
    %s466 = scalar_lea.sflag [#allocation4], 1
    %467 = vsyncpa %s466, 1
    %468 = vsyncpa [#allocation5], 1
    %s469 = scalar_lea.sflag [#allocation5], 1
    %470 = vsyncpa %s469, 1

</llo_original>
